<compile_context>
chip_gen: v6e
topology: v6e:2x2x1
jax: 0.10.0
libtpu: 0.0.40
codegen_flags: <defaults>
</compile_context>

<pallas_src>
import jax
import jax.numpy as jnp
from jax.experimental import pallas as pl
from jax.experimental.pallas import tpu as pltpu


NUM_STATE = 4       # CartPole-v0 observation dim
HIDDEN = 100        # fc1 output dim (logical)
HIDDEN_PAD = 128    # fc1 output dim padded to a full lane width
LANE = 128          # lane-dense output width
MAX_TILE = 512      # max batch rows per grid step


def critic_kernel(x_ref, w1_ref, b1_ref, w2_ref, b2_ref, out_ref):
    # x_ref  : (TB, NUM_STATE)        f32
    # w1_ref : (NUM_STATE, HIDDEN_PAD) f32, cols [HIDDEN:] are zero
    # b1_ref : (1, HIDDEN_PAD)         f32, cols [HIDDEN:] are zero
    # w2_ref : (1, HIDDEN_PAD)         f32, row form of fc2 weight, zero-padded
    # b2_ref : (1, 1)                  f32
    # out_ref: (TB, LANE)              f32, value broadcast across lanes
    x = x_ref[...]

    # ----- Layer 1 on the VPU: h = x @ W1 + b1 as K=4 broadcast multiply-adds.
    # (An MXU matmul with K=4 would be dominated by fill/drain latency.)
    h = b1_ref[...]                                   # (1, H) -> broadcasts to (TB, H)
    for k in range(NUM_STATE):                        # static unroll, K=4
        h = h + x[:, k:k + 1] * w1_ref[k:k + 1, :]
    h = jnp.maximum(h, 0.0)                           # ReLU on the VPU

    # ----- Layer 2 as VPU multiply + XLU lane reduction (N=1 "matmul").
    v = jnp.sum(h * w2_ref[...], axis=-1, keepdims=True) + b2_ref[...]  # (TB, 1)

    # Lane-dense store: replicate the value across all 128 lanes (unmasked vst).
    out_ref[...] = jnp.broadcast_to(v, out_ref.shape).astype(out_ref.dtype)


def _round_up(n, m):
    return ((n + m - 1) // m) * m


@jax.jit
def critic_forward(x, w1, b1, w2, b2):
    """Critic forward pass.

    x : (B, NUM_STATE) float32
    w1: (NUM_STATE, HIDDEN)   (transposed vs. PyTorch's (out, in))
    b1: (HIDDEN,)
    w2: (HIDDEN, 1)           (transposed vs. PyTorch's (1, HIDDEN))
    b2: (1,)
    returns: (B, 1) float32
    """
    B = x.shape[0]
    # Adaptive batch tile: small batches pad only to a multiple of 8 sublanes;
    # large batches use MAX_TILE rows per grid step.
    tile = MAX_TILE if B >= MAX_TILE else _round_up(B, 8)
    B_pad = _round_up(B, tile)

    # Zero padding (math-preserving) into lane/sublane-aligned slabs.
    x_p = jnp.zeros((B_pad, NUM_STATE), jnp.float32).at[:B].set(
        x.astype(jnp.float32))
    w1_p = jnp.zeros((NUM_STATE, HIDDEN_PAD), jnp.float32).at[:, :HIDDEN].set(
        w1.astype(jnp.float32))
    b1_p = jnp.zeros((1, HIDDEN_PAD), jnp.float32).at[:, :HIDDEN].set(
        b1.reshape(1, HIDDEN).astype(jnp.float32))
    w2_p = jnp.zeros((1, HIDDEN_PAD), jnp.float32).at[:, :HIDDEN].set(
        w2.reshape(1, HIDDEN).astype(jnp.float32))
    b2_p = b2.reshape(1, 1).astype(jnp.float32)

    grid = (B_pad // tile,)
    out = pl.pallas_call(
        critic_kernel,
        out_shape=jax.ShapeDtypeStruct((B_pad, LANE), jnp.float32),
        grid=grid,
        in_specs=[
            # x: one sublane-aligned batch tile per grid step.
            pl.BlockSpec((tile, NUM_STATE), lambda i: (i, 0)),
            # Weights/biases: constant index_maps -> fetched once, kept
            # resident in VMEM across all batch tiles.
            pl.BlockSpec((NUM_STATE, HIDDEN_PAD), lambda i: (0, 0)),
            pl.BlockSpec((1, HIDDEN_PAD), lambda i: (0, 0)),
            pl.BlockSpec((1, HIDDEN_PAD), lambda i: (0, 0)),
            pl.BlockSpec((1, 1), lambda i: (0, 0)),
        ],
        out_specs=pl.BlockSpec((tile, LANE), lambda i: (i, 0)),
        compiler_params=pltpu.CompilerParams(
            # Batch tiles are independent -> shard across TCs (megacore).
            dimension_semantics=("parallel",)),
    )(x_p, w1_p, b1_p, w2_p, b2_p)

    # The value is replicated across lanes; take lane 0 and drop batch padding.
    return out[:B, :1]


def init_params(key):
    """Deterministic init mimicking PyTorch nn.Linear default U(+/- 1/sqrt(fan_in))."""
    k1, k2, k3, k4 = jax.random.split(key, 4)
    bound1 = 1.0 / jnp.sqrt(NUM_STATE)
    bound2 = 1.0 / jnp.sqrt(HIDDEN)
    # Stored as (in, out) — transposed relative to PyTorch's (out, in).
    w1 = jax.random.uniform(k1, (NUM_STATE, HIDDEN), jnp.float32, -bound1, bound1)
    b1 = jax.random.uniform(k2, (HIDDEN,), jnp.float32, -bound1, bound1)
    w2 = jax.random.uniform(k3, (HIDDEN, 1), jnp.float32, -bound2, bound2)
    b2 = jax.random.uniform(k4, (1,), jnp.float32, -bound2, bound2)
    return w1, b1, w2, b2


if __name__ == "__main__":
    key = jax.random.PRNGKey(0)
    k_x, k_p = jax.random.split(key)

    batch = 2
    x = jax.random.normal(k_x, (batch, NUM_STATE), jnp.float32)
    w1, b1, w2, b2 = init_params(k_p)

    value = critic_forward(x, w1, b1, w2, b2)
    value = jax.block_until_ready(value)

    # Reference check in plain JAX (same math as the PyTorch forward).
    ref = jnp.maximum(x @ w1 + b1, 0.0) @ w2 + b2
    assert value.shape == (batch, 1)
    assert jnp.allclose(value, ref, atol=1e-5, rtol=1e-5), (value, ref)

    print("KERNEL_OK")
</pallas_src>

<mosaic_0001>
module attributes {stable_mosaic.version = 11 : i64} {
  func.func @critic_kernel(%arg0: i32, %arg1: memref<8x4xf32, #tpu.memory_space<vmem>>, %arg2: memref<4x128xf32, #tpu.memory_space<vmem>>, %arg3: memref<1x128xf32, #tpu.memory_space<vmem>>, %arg4: memref<1x128xf32, #tpu.memory_space<vmem>>, %arg5: memref<1x1xf32, #tpu.memory_space<vmem>>, %arg6: memref<8x128xf32, #tpu.memory_space<vmem>>) attributes {dimension_semantics = [#tpu.dimension_semantics<parallel>], iteration_bounds = array<i64: 1>, scalar_prefetch = 0 : i64, scratch_operands = 0 : i64, tpu.core_type = #tpu.core_type<tc>, window_params = [{transform_indices = @transform_0, window_bounds = array<i64: 8, 4>}, {pipeline_mode = #tpu.pipeline_mode<synchronous>, transform_indices = @transform_1, window_bounds = array<i64: 4, 128>}, {pipeline_mode = #tpu.pipeline_mode<synchronous>, transform_indices = @transform_2, window_bounds = array<i64: 1, 128>}, {pipeline_mode = #tpu.pipeline_mode<synchronous>, transform_indices = @transform_3, window_bounds = array<i64: 1, 128>}, {pipeline_mode = #tpu.pipeline_mode<synchronous>, transform_indices = @transform_4, window_bounds = array<i64: 1, 1>}, {transform_indices = @transform_5, window_bounds = array<i64: 8, 128>}]} {
    %c0 = arith.constant 0 : index
    %c0_0 = arith.constant 0 : index
    %0 = vector.load %arg1[%c0, %c0_0] : memref<8x4xf32, #tpu.memory_space<vmem>>, vector<8x4xf32>
    %c0_1 = arith.constant 0 : index
    %c0_2 = arith.constant 0 : index
    %1 = vector.load %arg3[%c0_1, %c0_2] : memref<1x128xf32, #tpu.memory_space<vmem>>, vector<1x128xf32>
    %2 = vector.extract_strided_slice %0 {offsets = [0, 0], sizes = [8, 1], strides = [1, 1]} : vector<8x4xf32> to vector<8x1xf32>
    %c0_3 = arith.constant 0 : index
    %c0_4 = arith.constant 0 : index
    %3 = vector.load %arg2[%c0_3, %c0_4] : memref<4x128xf32, #tpu.memory_space<vmem>>, vector<1x128xf32>
    %4 = vector.broadcast %2 : vector<8x1xf32> to vector<8x128xf32>
    %5 = vector.broadcast %3 : vector<1x128xf32> to vector<8x128xf32>
    %6 = arith.mulf %4, %5 : vector<8x128xf32>
    %7 = vector.broadcast %1 : vector<1x128xf32> to vector<8x128xf32>
    %8 = arith.addf %7, %6 : vector<8x128xf32>
    %9 = vector.extract_strided_slice %0 {offsets = [0, 1], sizes = [8, 1], strides = [1, 1]} : vector<8x4xf32> to vector<8x1xf32>
    %c1 = arith.constant 1 : index
    %c0_5 = arith.constant 0 : index
    %10 = vector.load %arg2[%c1, %c0_5] : memref<4x128xf32, #tpu.memory_space<vmem>>, vector<1x128xf32>
    %11 = vector.broadcast %9 : vector<8x1xf32> to vector<8x128xf32>
    %12 = vector.broadcast %10 : vector<1x128xf32> to vector<8x128xf32>
    %13 = arith.mulf %11, %12 : vector<8x128xf32>
    %14 = arith.addf %8, %13 : vector<8x128xf32>
    %15 = vector.extract_strided_slice %0 {offsets = [0, 2], sizes = [8, 1], strides = [1, 1]} : vector<8x4xf32> to vector<8x1xf32>
    %c2 = arith.constant 2 : index
    %c0_6 = arith.constant 0 : index
    %16 = vector.load %arg2[%c2, %c0_6] : memref<4x128xf32, #tpu.memory_space<vmem>>, vector<1x128xf32>
    %17 = vector.broadcast %15 : vector<8x1xf32> to vector<8x128xf32>
    %18 = vector.broadcast %16 : vector<1x128xf32> to vector<8x128xf32>
    %19 = arith.mulf %17, %18 : vector<8x128xf32>
    %20 = arith.addf %14, %19 : vector<8x128xf32>
    %21 = vector.extract_strided_slice %0 {offsets = [0, 3], sizes = [8, 1], strides = [1, 1]} : vector<8x4xf32> to vector<8x1xf32>
    %c3 = arith.constant 3 : index
    %c0_7 = arith.constant 0 : index
    %22 = vector.load %arg2[%c3, %c0_7] : memref<4x128xf32, #tpu.memory_space<vmem>>, vector<1x128xf32>
    %23 = vector.broadcast %21 : vector<8x1xf32> to vector<8x128xf32>
    %24 = vector.broadcast %22 : vector<1x128xf32> to vector<8x128xf32>
    %25 = arith.mulf %23, %24 : vector<8x128xf32>
    %26 = arith.addf %20, %25 : vector<8x128xf32>
    %cst = arith.constant 0.000000e+00 : f32
    %27 = vector.broadcast %cst : f32 to vector<8x128xf32>
    %28 = arith.maximumf %26, %27 : vector<8x128xf32>
    %c0_8 = arith.constant 0 : index
    %c0_9 = arith.constant 0 : index
    %29 = vector.load %arg4[%c0_8, %c0_9] : memref<1x128xf32, #tpu.memory_space<vmem>>, vector<1x128xf32>
    %30 = vector.broadcast %29 : vector<1x128xf32> to vector<8x128xf32>
    %31 = arith.mulf %28, %30 : vector<8x128xf32>
    %cst_10 = arith.constant dense<0.000000e+00> : vector<8xf32>
    %32 = vector.multi_reduction <add>, %31, %cst_10 [1] : vector<8x128xf32> to vector<8xf32>
    %33 = vector.shape_cast %32 : vector<8xf32> to vector<8x1xf32>
    %c0_11 = arith.constant 0 : index
    %c0_12 = arith.constant 0 : index
    %34 = vector.load %arg5[%c0_11, %c0_12] : memref<1x1xf32, #tpu.memory_space<vmem>>, vector<1x1xf32>
    %35 = vector.broadcast %34 : vector<1x1xf32> to vector<8x1xf32>
    %36 = arith.addf %33, %35 : vector<8x1xf32>
    %37 = vector.shape_cast %36 : vector<8x1xf32> to vector<8x1xf32>
    %38 = vector.broadcast %37 : vector<8x1xf32> to vector<8x128xf32>
    %c0_13 = arith.constant 0 : index
    %c0_14 = arith.constant 0 : index
    %39 = vector.load %arg6[%c0_13, %c0_14] : memref<8x128xf32, #tpu.memory_space<vmem>>, vector<8x128xf32>
    tpu.vector_store %arg6[%c0_13, %c0_14], %38 {strides = array<i32>} : memref<8x128xf32, #tpu.memory_space<vmem>>, vector<8x128xf32>,
    return
  }
  func.func @transform_0(%arg0: i32) -> (i32, i32) {
    %c0_i32 = arith.constant 0 : i32
    %c0_i32_0 = arith.constant 0 : i32
    return %arg0, %c0_i32 : i32, i32
  }
  func.func @transform_1(%arg0: i32) -> (i32, i32) {
    %c0_i32 = arith.constant 0 : i32
    %c0_i32_0 = arith.constant 0 : i32
    %c0_i32_1 = arith.constant 0 : i32
    return %c0_i32, %c0_i32_0 : i32, i32
  }
  func.func @transform_2(%arg0: i32) -> (i32, i32) {
    %c0_i32 = arith.constant 0 : i32
    %c0_i32_0 = arith.constant 0 : i32
    %c0_i32_1 = arith.constant 0 : i32
    return %c0_i32, %c0_i32_0 : i32, i32
  }
  func.func @transform_3(%arg0: i32) -> (i32, i32) {
    %c0_i32 = arith.constant 0 : i32
    %c0_i32_0 = arith.constant 0 : i32
    %c0_i32_1 = arith.constant 0 : i32
    return %c0_i32, %c0_i32_0 : i32, i32
  }
  func.func @transform_4(%arg0: i32) -> (i32, i32) {
    %c0_i32 = arith.constant 0 : i32
    %c0_i32_0 = arith.constant 0 : i32
    %c0_i32_1 = arith.constant 0 : i32
    return %c0_i32, %c0_i32_0 : i32, i32
  }
  func.func @transform_5(%arg0: i32) -> (i32, i32) {
    %c0_i32 = arith.constant 0 : i32
    %c0_i32_0 = arith.constant 0 : i32
    return %arg0, %c0_i32 : i32, i32
  }
}

</mosaic_0001>

<llo_original>
// kernel: critic_forward.1
$region0: #{critic_forward.1}
  #allocation0 [shape = 'u32[]', space=smem, size = 0x4, offset = 0x4, fixed_abs, tag = 'smem constant byte address 0x4 - core index']
  #allocation1 [shape = 'u32[144,128]{1,0:T(1,128)}', space=vmem, size = 0x12000, scoped, tag = 'internal scratch']
  #allocation2 [shape = 'f32[1,1]{1,0:T(1,128)S(1)}', space=vmem, size = 0x200, scoped, tag = 'scoped memory for critic_forward.1']
  %s0 = inlined_call_operand.vmem [shape: f32[8,4], index: 0, kind: input, shape index: {}]
  %s1 = inlined_call_operand.vmem [shape: f32[4,128], index: 1, kind: input, shape index: {}]
  %s2 = inlined_call_operand.vmem [shape: f32[1,128], index: 2, kind: input, shape index: {}]
  %s3 = inlined_call_operand.vmem [shape: f32[1,128], index: 3, kind: input, shape index: {}]
  %s4 = inlined_call_operand.<no memory space> [shape: f32[1,1], index: 4, kind: input, shape index: {}]
  %s5 = inlined_call_operand.vmem [shape: f32[8,128], index: 5, kind: output, shape index: {}]
  %s6 = sld [smem:[#allocation0]]
  $region30: #{critic_forward.1} parent=0
    _
  %s8 = ssub.s32 1, %s6
  %s9 = scalar_select 0, %s8, %s6
  %v10 = vstv %s4
  %11 = vst [vmem:[#allocation2] sm:$0x1] %v10
  // Predicated region
  $region2: #{critic_forward.1} parent=0 // pred_check
    _
  $region3: #{critic_forward.1} parent=0 // pred_check_branch
    %13 = sbr.rel (0) target = $region5
  $region4: #{critic_forward.1} parent=0 // pred_region
    _
  $region5: #{critic_forward.1} parent=0 // pred_fallthru
    _
  // Predicated region
  $region6: #{critic_forward.1} parent=0 // pred_check
    _
  $region7: #{critic_forward.1} parent=0 // pred_check_branch
    %15 = sbr.rel (0) target = $region9
  $region8: #{critic_forward.1} parent=0 // pred_region
    _
  $region9: #{critic_forward.1} parent=0 // pred_fallthru
    _
  // Predicated region
  $region10: #{critic_forward.1} parent=0 // pred_check
    _
  $region11: #{critic_forward.1} parent=0 // pred_check_branch
    %17 = sbr.rel (0) target = $region13
  $region12: #{critic_forward.1} parent=0 // pred_region
    _
  $region13: #{critic_forward.1} parent=0 // pred_fallthru
    _
  // Predicated region
  $region14: #{critic_forward.1} parent=0 // pred_check
    _
  $region15: #{critic_forward.1} parent=0 // pred_check_branch
    %19 = sbr.rel (0) target = $region17
  $region16: #{critic_forward.1} parent=0 // pred_region
    _
  $region17: #{critic_forward.1} parent=0 // pred_fallthru
    _
  // Predicated region
  $region18: #{critic_forward.1} parent=0 // pred_check
    _
  $region19: #{critic_forward.1} parent=0 // pred_check_branch
    %21 = sbr.rel (0) target = $region21
  $region20: #{critic_forward.1} parent=0 // pred_region
    _
  $region21: #{critic_forward.1} parent=0 // pred_fallthru
    _
  %v22 = vld [vmem:[%s0] sm:$0xff]
  %v23 = vld [vmem:[%s2] sm:$0x1]
  %v24 = vld [vmem:[%s1] sm:$0x1]
  %26 = vset.pattern.permute.xlu0 0
  %27 = vperm.xlu0 %26, %v22
  %v28 = vpop.permute.xlu0 %27
  %v30 = vlaneseq
  %v31 = vshrl.u32 %v30, 7
  %v32 = vsub.s32 0, %v31
  %v33 = vrot.slane %v24, %v32
  %v34 = vmul.f32 %v28, %v33
  %v36 = vlaneseq
  %v37 = vshrl.u32 %v36, 7
  %v38 = vsub.s32 0, %v37
  %v39 = vrot.slane %v23, %v38
  %v41 = vadd.f32 %v39, %v34
  %v42 = vld [vmem:[%s1 + $0x1] sm:$0x1]
  %43 = vset.pattern.permute.xlu0 1
  %44 = vperm.xlu0 %43, %v22
  %v45 = vpop.permute.xlu0 %44
  %v47 = vlaneseq
  %v48 = vshrl.u32 %v47, 7
  %v49 = vsub.s32 0, %v48
  %v50 = vrot.slane %v42, %v49
  %v51 = vmul.f32 %v45, %v50
  %v52 = vadd.f32 %v41, %v51
  %v53 = vld [vmem:[%s1 + $0x2] sm:$0x1]
  %54 = vset.pattern.permute.xlu0 2
  %55 = vperm.xlu0 %54, %v22
  %v56 = vpop.permute.xlu0 %55
  %v58 = vlaneseq
  %v59 = vshrl.u32 %v58, 7
  %v60 = vsub.s32 0, %v59
  %v61 = vrot.slane %v53, %v60
  %v62 = vmul.f32 %v56, %v61
  %v63 = vadd.f32 %v52, %v62
  %v64 = vld [vmem:[%s1 + $0x3] sm:$0x1]
  %65 = vset.pattern.permute.xlu0 3
  %66 = vperm.xlu0 %65, %v22
  %v67 = vpop.permute.xlu0 %66
  %v69 = vlaneseq
  %v70 = vshrl.u32 %v69, 7
  %v71 = vsub.s32 0, %v70
  %v72 = vrot.slane %v64, %v71
  %v73 = vmul.f32 %v67, %v72
  %v74 = vadd.f32 %v63, %v73
  %v75 = vmax.f32 %v74, 0.0
  %v76 = vld [vmem:[%s3] sm:$0x1]
  %v78 = vlaneseq
  %v79 = vshrl.u32 %v78, 7
  %v80 = vsub.s32 0, %v79
  %v81 = vrot.slane %v76, %v80
  %v83 = vmul.f32 %v75, %v81
  %84 = vadd.xlane.f32.xlu0 %v83
  %v85 = vpop.xlane.xlu0 %84
  %v86 = vld [vmem:[#allocation2] sm:$0x1]
  %v88 = vlaneseq
  %v89 = vshrl.u32 %v88, 7
  %v90 = vsub.s32 0, %v89
  %v91 = vrot.slane %v86, %v90
  %v93 = vadd.f32 %v85, %v91
  %95 = vset.pattern.permute.xlu0 0
  %96 = vperm.xlu0 %95, %v93
  %v97 = vpop.permute.xlu0 %96
  %99 = vst [vmem:[%s5] sm:$0xff] %v97
  // Predicated region
  $region22: #{critic_forward.1} parent=0 // pred_check
    _
  $region23: #{critic_forward.1} parent=0 // pred_check_branch
    %101 = sbr.rel (0) target = $region25
  $region24: #{critic_forward.1} parent=0 // pred_region
    _
  $region25: #{critic_forward.1} parent=0 // pred_fallthru
    _
  // Predicated region
  $region26: #{critic_forward.1} parent=0 // pred_check
    _
  $region27: #{critic_forward.1} parent=0 // pred_check_branch
    %103 = sbr.rel (0) target = $region29
  $region28: #{critic_forward.1} parent=0 // pred_region
    _
  $region29: #{critic_forward.1} parent=0 // pred_fallthru
    _

</llo_original>
